<compile_context>
chip_gen: v6e
topology: v6e:2x2x1
jax: 0.10.0
libtpu: 0.0.40
codegen_flags: <defaults>
</compile_context>

<pallas_src>
import numpy as np
import jax
import jax.numpy as jnp
from jax.experimental import pallas as pl
from jax.experimental.pallas import tpu as pltpu

# column order inside packed_input.data (mirrors TXT_WORD/TXT_LEMMA/TXT_POS/TXT_NER)
TXT_WORD, TXT_LEMMA, TXT_POS, TXT_NER = 0, 1, 2, 3

# Kept HIGHEST on the hoisted (out-of-recurrence) projection so it matches the reference
# bit-for-bit; review notes it can be dropped to DEFAULT if 1e-3 accuracy is the real bar.
_HI = jax.lax.Precision.HIGHEST


# ------------------------------------------------------------------ Pallas kernel
def _bilstm_kernel(gx_ref, whh_ref, o_ref):
    """Single-grid-step bidirectional LSTM recurrence over one batch block.

    gx_ref : (T_pad, Bb, 8H) f32  precomputed input-gate projections (x @ W_ih + b),
             lane layout [i_f,i_b, f_f,f_b, o_f,o_b, g_f,g_b] (blocks H wide); forward
             blocks hold time t, backward blocks already hold reversed time (row t ==
             original time T-1-t).
    whh_ref: (2H, 8H) f32  block-diagonal recurrent weights (both directions fused),
             same column layout as gx.
    o_ref  : (Tc, Bb, G*2H) f32  each row packs G consecutive kernel-time steps of
             h = [h_fwd | h_bwd] -> one lane-dense 128-lane store per G steps.
    """
    T_pad, Bb, H8 = gx_ref.shape
    H2 = H8 // 4                      # 2 * hidden
    Tc, _, lanes = o_ref.shape
    G = lanes // H2                   # timesteps packed per output row

    whh = whh_ref[...]                # load the fused recurrent weight once

    def chunk(tc, carry):
        h, c = carry                  # (Bb, 2H) each, lanes = [fwd | bwd]
        hs = []
        for g in range(G):            # static unroll inside the chunk
            t = tc * G + g
            # one fused block-diagonal recurrent matmul for BOTH directions
            gates = gx_ref[t] + jnp.dot(h, whh, preferred_element_type=jnp.float32)
            sig = jax.nn.sigmoid(gates[:, : 3 * H2])     # one contiguous sigmoid slab
            i = sig[:, 0:H2]
            f = sig[:, H2:2 * H2]
            o = sig[:, 2 * H2:3 * H2]
            gg = jnp.tanh(gates[:, 3 * H2:])             # one contiguous tanh slab
            c = f * c + i * gg
            h = o * jnp.tanh(c)
            hs.append(h)
        o_ref[tc] = jnp.concatenate(hs, axis=-1)         # single lane-dense store
        return h, c

    zeros = jnp.zeros((Bb, H2), jnp.float32)
    jax.lax.fori_loop(0, Tc, chunk, (zeros, zeros), unroll=2)


# ------------------------------------------------------------------ weight fusion helpers
def _reorder_ifog(w, H):
    """(..., 4H) with PyTorch gate blocks [i, f, g, o] -> (..., 4, H) blocks [i, f, o, g]."""
    w = w.reshape(w.shape[:-1] + (4, H))
    return jnp.stack([w[..., 0, :], w[..., 1, :], w[..., 3, :], w[..., 2, :]], axis=-2)


def _interleave_dirs(wf, wb, H):
    """Fuse fwd/bwd weights into the kernel column layout [i_f,i_b,f_f,f_b,o_f,o_b,g_f,g_b]."""
    w = jnp.stack([_reorder_ifog(wf, H), _reorder_ifog(wb, H)], axis=-2)   # (..., 4, 2, H)
    return w.reshape(w.shape[:-3] + (8 * H,))


def bilstm_pallas(x, params):
    """x: (T, B, D) float32.  Returns (T, B, 2H) float32 == cat([h_fwd, h_bwd], -1)."""
    T, B, D = x.shape
    H = params["whh_f"].shape[0]
    H2, H8 = 2 * H, 8 * H

    # ---- SINGLE fused input-projection matmul (both directions, pre-interleaved columns)
    wih = _interleave_dirs(params["wih_f"], params["wih_b"], H).astype(jnp.float32)    # (D, 8H)
    bias = _interleave_dirs(params["b_f"], params["b_b"], H).astype(jnp.float32)       # (1, 8H)
    gx = (jnp.dot(x.reshape(T * B, D), wih, precision=_HI) + bias).reshape(T, B, H8)

    # backward-direction lanes see reversed time: one elementwise select, no re-interleave
    lane_is_bwd = ((jnp.arange(H8) // H) % 2) == 1
    gx = jnp.where(lane_is_bwd, gx[::-1], gx).astype(jnp.float32)

    # ---- pack G timesteps per 128-lane output row (lane-dense stores)
    G = (128 // H2) if (H2 <= 128 and 128 % H2 == 0) else 1
    T_pad = ((T + G - 1) // G) * G
    Tc = T_pad // G

    # ---- batch padding + batch-block grid ("parallel" -> both TCs on v7x)
    if B <= 128:
        b_blk = ((B + 7) // 8) * 8
        B_pad = b_blk
    else:
        b_blk = 128
        B_pad = ((B + 127) // 128) * 128
    nb = B_pad // b_blk

    if T_pad != T or B_pad != B:
        gx = jnp.pad(gx, ((0, T_pad - T), (0, B_pad - B), (0, 0)))

    # ---- fused block-diagonal recurrent weight (2H, 8H) matching the gx column layout
    whh_f = _reorder_ifog(params["whh_f"].astype(jnp.float32), H)       # (H, 4, H)
    whh_b = _reorder_ifog(params["whh_b"].astype(jnp.float32), H)
    z = jnp.zeros_like(whh_f)
    whh = jnp.concatenate(
        [jnp.stack([whh_f, z], axis=-2).reshape(H, H8),    # rows driven by h_fwd
         jnp.stack([z, whh_b], axis=-2).reshape(H, H8)],   # rows driven by h_bwd
        axis=0)                                            # (2H, 8H)

    out = pl.pallas_call(
        _bilstm_kernel,
        out_shape=jax.ShapeDtypeStruct((Tc, B_pad, G * H2), jnp.float32),
        grid=(nb,),
        in_specs=[pl.BlockSpec((T_pad, b_blk, H8), lambda b: (0, b, 0)),
                  pl.BlockSpec((H2, H8), lambda b: (0, 0))],
        out_specs=pl.BlockSpec((Tc, b_blk, G * H2), lambda b: (0, b, 0)),
        compiler_params=pltpu.CompilerParams(dimension_semantics=("parallel",)),
    )(gx, whh)

    # unpack: (Tc, B, G, 2H) -> kernel-time major (T_pad, B, 2H); drop padding
    out = out.reshape(Tc, B_pad, G, H2).transpose(0, 2, 1, 3).reshape(T_pad, B_pad, H2)
    out = out[:T, :B]
    # backward half at kernel-time t is original time T-1-t -> flip once in bulk
    return jnp.concatenate([out[:, :, :H], out[::-1, :, H:]], axis=-1)


# ------------------------------------------------------------------ module wrapper
def sentence_encoder_forward(token_ids, embs, lstm_params):
    """token_ids: (T, B, 4) int32 (packed_input.data reshaped to dense time-major).
    Returns (T, B, 2H) encodings (PackedSequence.data equivalent)."""
    # embedding lookups (glue — gathers stay in plain JAX)
    word = jnp.take(embs["word_fix_lut"], token_ids[..., TXT_WORD], axis=0)
    lemma = jnp.take(embs["lemma_lut"], token_ids[..., TXT_LEMMA], axis=0)
    pos = jnp.take(embs["pos_lut"], token_ids[..., TXT_POS], axis=0)
    ner = jnp.take(embs["ner_lut"], token_ids[..., TXT_NER], axis=0)
    # drop_emb / alpha_dropout are identity in eval mode
    emb = jnp.concatenate([word, lemma, pos, ner], axis=-1)  # (T, B, D)
    # TODO(synk): char_encoder / bert_model branches omitted (None in this config).
    # TODO(synk): variable-length PackedSequence masking not modeled (equal-length batch).
    return bilstm_pallas(emb, lstm_params)


# ------------------------------------------------------------------ pure-JAX reference
def _lstm_ref_dir(x, wih, whh, b, reverse=False):
    T, B, D = x.shape
    H = whh.shape[0]

    def stepfn(carry, xt):
        h, c = carry
        g = jnp.dot(xt, wih, precision=_HI) + jnp.dot(h, whh, precision=_HI) + b
        i = jax.nn.sigmoid(g[:, :H])
        f = jax.nn.sigmoid(g[:, H:2 * H])
        gg = jnp.tanh(g[:, 2 * H:3 * H])
        o = jax.nn.sigmoid(g[:, 3 * H:])
        c = f * c + i * gg
        h = o * jnp.tanh(c)
        return (h, c), h

    xs = x[::-1] if reverse else x
    _, hs = jax.lax.scan(stepfn, (jnp.zeros((B, H)), jnp.zeros((B, H))), xs)
    return hs[::-1] if reverse else hs


def sentence_encoder_ref(token_ids, embs, p):
    word = jnp.take(embs["word_fix_lut"], token_ids[..., TXT_WORD], axis=0)
    lemma = jnp.take(embs["lemma_lut"], token_ids[..., TXT_LEMMA], axis=0)
    pos = jnp.take(embs["pos_lut"], token_ids[..., TXT_POS], axis=0)
    ner = jnp.take(embs["ner_lut"], token_ids[..., TXT_NER], axis=0)
    emb = jnp.concatenate([word, lemma, pos, ner], axis=-1)
    fwd = _lstm_ref_dir(emb, p["wih_f"], p["whh_f"], p["b_f"][0], reverse=False)
    bwd = _lstm_ref_dir(emb, p["wih_b"], p["whh_b"], p["b_b"][0], reverse=True)
    return jnp.concatenate([fwd, bwd], axis=-1)


# ------------------------------------------------------------------ main
if __name__ == "__main__":
    key = jax.random.PRNGKey(0)

    # small shapes consistent with the module's forward
    T, B = 8, 2                        # sequence length, batch
    V_WORD, V_LEMMA, V_POS, V_NER = 50, 40, 10, 10
    D_WORD, D_LEMMA, D_POS, D_NER = 8, 8, 4, 4
    D = D_WORD + D_LEMMA + D_POS + D_NER          # inputSize = 24
    H = 16                                        # hidden per direction (8H = 128 lanes)
    # txt_rnn_size = src_enc_size = 2*H = 32 (brnn=True), txt_enlayers = 1

    keys = jax.random.split(key, 16)

    # embedding tables (nn.Embedding default: N(0, 1))
    embs = {
        "word_fix_lut": jax.random.normal(keys[0], (V_WORD, D_WORD), jnp.float32),
        "lemma_lut":    jax.random.normal(keys[1], (V_LEMMA, D_LEMMA), jnp.float32),
        "pos_lut":      jax.random.normal(keys[2], (V_POS, D_POS), jnp.float32),
        "ner_lut":      jax.random.normal(keys[3], (V_NER, D_NER), jnp.float32),
    }

    # LSTM weights (PyTorch default init: U(-1/sqrt(H), 1/sqrt(H))), stored transposed
    # so we compute x @ W_ih + h @ W_hh; biases = b_ih + b_hh fused. Gate order [i,f,g,o].
    s = 1.0 / np.sqrt(H)
    U = lambda k, shape: jax.random.uniform(k, shape, jnp.float32, -s, s)
    lstm_params = {
        "wih_f": U(keys[4], (D, 4 * H)),
        "whh_f": U(keys[5], (H, 4 * H)),
        "b_f":   U(keys[6], (1, 4 * H)) + U(keys[7], (1, 4 * H)),
        "wih_b": U(keys[8], (D, 4 * H)),
        "whh_b": U(keys[9], (H, 4 * H)),
        "b_b":   U(keys[10], (1, 4 * H)) + U(keys[11], (1, 4 * H)),
    }

    # token indices: (T, B, 4) — columns [word, lemma, pos, ner]
    token_ids = jnp.stack([
        jax.random.randint(keys[12], (T, B), 0, V_WORD),
        jax.random.randint(keys[13], (T, B), 0, V_LEMMA),
        jax.random.randint(keys[14], (T, B), 0, V_POS),
        jax.random.randint(keys[15], (T, B), 0, V_NER),
    ], axis=-1).astype(jnp.int32)

    fwd_fn = jax.jit(sentence_encoder_forward)
    out = jax.block_until_ready(fwd_fn(token_ids, embs, lstm_params))

    ref = jax.block_until_ready(sentence_encoder_ref(token_ids, embs, lstm_params))
    # in-kernel recurrent dot runs at Mosaic's native MXU precision (reference uses
    # HIGHEST) -> allow a small tolerance margin
    np.testing.assert_allclose(np.asarray(out), np.asarray(ref), rtol=2e-3, atol=2e-3)
    assert out.shape == (T, B, 2 * H)

    print("KERNEL_OK")
</pallas_src>

<mosaic_0001>
module attributes {stable_mosaic.version = 11 : i64} {
  func.func @_bilstm_kernel(%arg0: i32, %arg1: memref<8x8x128xf32, #tpu.memory_space<vmem>>, %arg2: memref<32x128xf32, #tpu.memory_space<vmem>>, %arg3: memref<2x8x128xf32, #tpu.memory_space<vmem>>) attributes {dimension_semantics = [#tpu.dimension_semantics<parallel>], iteration_bounds = array<i64: 1>, scalar_prefetch = 0 : i64, scratch_operands = 0 : i64, tpu.core_type = #tpu.core_type<tc>, window_params = [{transform_indices = @transform_0, window_bounds = array<i64: 8, 8, 128>}, {pipeline_mode = #tpu.pipeline_mode<synchronous>, transform_indices = @transform_1, window_bounds = array<i64: 32, 128>}, {transform_indices = @transform_2, window_bounds = array<i64: 2, 8, 128>}]} {
    %c0 = arith.constant 0 : index
    %c0_0 = arith.constant 0 : index
    %0 = vector.load %arg2[%c0, %c0_0] : memref<32x128xf32, #tpu.memory_space<vmem>>, vector<32x128xf32>
    %cst = arith.constant 0.000000e+00 : f32
    %1 = vector.broadcast %cst : f32 to vector<8x32xf32>
    %c0_i32 = arith.constant 0 : i32
    %c4_i32 = arith.constant 4 : i32
    %2 = arith.muli %c0_i32, %c4_i32 : i32
    %c0_i32_1 = arith.constant 0 : i32
    %3 = arith.addi %2, %c0_i32_1 : i32
    %4 = arith.index_cast %3 : i32 to index
    %c0_2 = arith.constant 0 : index
    %c0_3 = arith.constant 0 : index
    %5 = vector.load %arg1[%4, %c0_2, %c0_3] : memref<8x8x128xf32, #tpu.memory_space<vmem>>, vector<1x8x128xf32>
    %6 = vector.shape_cast %5 : vector<1x8x128xf32> to vector<8x128xf32>
    %cst_4 = arith.constant dense<0.000000e+00> : vector<8x128xf32>
    %7 = tpu.matmul %1, %0, %cst_4 {dimension_numbers = #tpu.dot_dimension_numbers<[1], [0], [0], [1], [0, 0, 1, 1], [], []>} : vector<8x32xf32>, vector<32x128xf32>, vector<8x128xf32> -> vector<8x128xf32>
    %8 = arith.addf %6, %7 : vector<8x128xf32>
    %9 = vector.extract_strided_slice %8 {offsets = [0, 0], sizes = [8, 96], strides = [1, 1]} : vector<8x128xf32> to vector<8x96xf32>
    %10 = arith.negf %9 : vector<8x96xf32>
    %11 = math.exp %10 : vector<8x96xf32>
    %cst_5 = arith.constant 1.000000e+00 : f32
    %12 = vector.broadcast %cst_5 : f32 to vector<8x96xf32>
    %13 = arith.addf %12, %11 : vector<8x96xf32>
    %14 = arith.divf %12, %13 : vector<8x96xf32>
    %15 = vector.extract_strided_slice %14 {offsets = [0, 0], sizes = [8, 32], strides = [1, 1]} : vector<8x96xf32> to vector<8x32xf32>
    %16 = vector.extract_strided_slice %14 {offsets = [0, 32], sizes = [8, 32], strides = [1, 1]} : vector<8x96xf32> to vector<8x32xf32>
    %17 = vector.extract_strided_slice %14 {offsets = [0, 64], sizes = [8, 32], strides = [1, 1]} : vector<8x96xf32> to vector<8x32xf32>
    %18 = vector.extract_strided_slice %8 {offsets = [0, 96], sizes = [8, 32], strides = [1, 1]} : vector<8x128xf32> to vector<8x32xf32>
    %19 = math.tanh %18 : vector<8x32xf32>
    %20 = arith.mulf %16, %1 : vector<8x32xf32>
    %21 = arith.mulf %15, %19 : vector<8x32xf32>
    %22 = arith.addf %20, %21 : vector<8x32xf32>
    %23 = math.tanh %22 : vector<8x32xf32>
    %24 = arith.mulf %17, %23 : vector<8x32xf32>
    %c4_i32_6 = arith.constant 4 : i32
    %25 = arith.muli %c0_i32, %c4_i32_6 : i32
    %c1_i32 = arith.constant 1 : i32
    %26 = arith.addi %25, %c1_i32 : i32
    %27 = arith.index_cast %26 : i32 to index
    %c0_7 = arith.constant 0 : index
    %c0_8 = arith.constant 0 : index
    %28 = vector.load %arg1[%27, %c0_7, %c0_8] : memref<8x8x128xf32, #tpu.memory_space<vmem>>, vector<1x8x128xf32>
    %29 = vector.shape_cast %28 : vector<1x8x128xf32> to vector<8x128xf32>
    %cst_9 = arith.constant dense<0.000000e+00> : vector<8x128xf32>
    %30 = tpu.matmul %24, %0, %cst_9 {dimension_numbers = #tpu.dot_dimension_numbers<[1], [0], [0], [1], [0, 0, 1, 1], [], []>} : vector<8x32xf32>, vector<32x128xf32>, vector<8x128xf32> -> vector<8x128xf32>
    %31 = arith.addf %29, %30 : vector<8x128xf32>
    %32 = vector.extract_strided_slice %31 {offsets = [0, 0], sizes = [8, 96], strides = [1, 1]} : vector<8x128xf32> to vector<8x96xf32>
    %33 = arith.negf %32 : vector<8x96xf32>
    %34 = math.exp %33 : vector<8x96xf32>
    %cst_10 = arith.constant 1.000000e+00 : f32
    %35 = vector.broadcast %cst_10 : f32 to vector<8x96xf32>
    %36 = arith.addf %35, %34 : vector<8x96xf32>
    %37 = arith.divf %35, %36 : vector<8x96xf32>
    %38 = vector.extract_strided_slice %37 {offsets = [0, 0], sizes = [8, 32], strides = [1, 1]} : vector<8x96xf32> to vector<8x32xf32>
    %39 = vector.extract_strided_slice %37 {offsets = [0, 32], sizes = [8, 32], strides = [1, 1]} : vector<8x96xf32> to vector<8x32xf32>
    %40 = vector.extract_strided_slice %37 {offsets = [0, 64], sizes = [8, 32], strides = [1, 1]} : vector<8x96xf32> to vector<8x32xf32>
    %41 = vector.extract_strided_slice %31 {offsets = [0, 96], sizes = [8, 32], strides = [1, 1]} : vector<8x128xf32> to vector<8x32xf32>
    %42 = math.tanh %41 : vector<8x32xf32>
    %43 = arith.mulf %39, %22 : vector<8x32xf32>
    %44 = arith.mulf %38, %42 : vector<8x32xf32>
    %45 = arith.addf %43, %44 : vector<8x32xf32>
    %46 = math.tanh %45 : vector<8x32xf32>
    %47 = arith.mulf %40, %46 : vector<8x32xf32>
    %c4_i32_11 = arith.constant 4 : i32
    %48 = arith.muli %c0_i32, %c4_i32_11 : i32
    %c2_i32 = arith.constant 2 : i32
    %49 = arith.addi %48, %c2_i32 : i32
    %50 = arith.index_cast %49 : i32 to index
    %c0_12 = arith.constant 0 : index
    %c0_13 = arith.constant 0 : index
    %51 = vector.load %arg1[%50, %c0_12, %c0_13] : memref<8x8x128xf32, #tpu.memory_space<vmem>>, vector<1x8x128xf32>
    %52 = vector.shape_cast %51 : vector<1x8x128xf32> to vector<8x128xf32>
    %cst_14 = arith.constant dense<0.000000e+00> : vector<8x128xf32>
    %53 = tpu.matmul %47, %0, %cst_14 {dimension_numbers = #tpu.dot_dimension_numbers<[1], [0], [0], [1], [0, 0, 1, 1], [], []>} : vector<8x32xf32>, vector<32x128xf32>, vector<8x128xf32> -> vector<8x128xf32>
    %54 = arith.addf %52, %53 : vector<8x128xf32>
    %55 = vector.extract_strided_slice %54 {offsets = [0, 0], sizes = [8, 96], strides = [1, 1]} : vector<8x128xf32> to vector<8x96xf32>
    %56 = arith.negf %55 : vector<8x96xf32>
    %57 = math.exp %56 : vector<8x96xf32>
    %cst_15 = arith.constant 1.000000e+00 : f32
    %58 = vector.broadcast %cst_15 : f32 to vector<8x96xf32>
    %59 = arith.addf %58, %57 : vector<8x96xf32>
    %60 = arith.divf %58, %59 : vector<8x96xf32>
    %61 = vector.extract_strided_slice %60 {offsets = [0, 0], sizes = [8, 32], strides = [1, 1]} : vector<8x96xf32> to vector<8x32xf32>
    %62 = vector.extract_strided_slice %60 {offsets = [0, 32], sizes = [8, 32], strides = [1, 1]} : vector<8x96xf32> to vector<8x32xf32>
    %63 = vector.extract_strided_slice %60 {offsets = [0, 64], sizes = [8, 32], strides = [1, 1]} : vector<8x96xf32> to vector<8x32xf32>
    %64 = vector.extract_strided_slice %54 {offsets = [0, 96], sizes = [8, 32], strides = [1, 1]} : vector<8x128xf32> to vector<8x32xf32>
    %65 = math.tanh %64 : vector<8x32xf32>
    %66 = arith.mulf %62, %45 : vector<8x32xf32>
    %67 = arith.mulf %61, %65 : vector<8x32xf32>
    %68 = arith.addf %66, %67 : vector<8x32xf32>
    %69 = math.tanh %68 : vector<8x32xf32>
    %70 = arith.mulf %63, %69 : vector<8x32xf32>
    %c4_i32_16 = arith.constant 4 : i32
    %71 = arith.muli %c0_i32, %c4_i32_16 : i32
    %c3_i32 = arith.constant 3 : i32
    %72 = arith.addi %71, %c3_i32 : i32
    %73 = arith.index_cast %72 : i32 to index
    %c0_17 = arith.constant 0 : index
    %c0_18 = arith.constant 0 : index
    %74 = vector.load %arg1[%73, %c0_17, %c0_18] : memref<8x8x128xf32, #tpu.memory_space<vmem>>, vector<1x8x128xf32>
    %75 = vector.shape_cast %74 : vector<1x8x128xf32> to vector<8x128xf32>
    %cst_19 = arith.constant dense<0.000000e+00> : vector<8x128xf32>
    %76 = tpu.matmul %70, %0, %cst_19 {dimension_numbers = #tpu.dot_dimension_numbers<[1], [0], [0], [1], [0, 0, 1, 1], [], []>} : vector<8x32xf32>, vector<32x128xf32>, vector<8x128xf32> -> vector<8x128xf32>
    %77 = arith.addf %75, %76 : vector<8x128xf32>
    %78 = vector.extract_strided_slice %77 {offsets = [0, 0], sizes = [8, 96], strides = [1, 1]} : vector<8x128xf32> to vector<8x96xf32>
    %79 = arith.negf %78 : vector<8x96xf32>
    %80 = math.exp %79 : vector<8x96xf32>
    %cst_20 = arith.constant 1.000000e+00 : f32
    %81 = vector.broadcast %cst_20 : f32 to vector<8x96xf32>
    %82 = arith.addf %81, %80 : vector<8x96xf32>
    %83 = arith.divf %81, %82 : vector<8x96xf32>
    %84 = vector.extract_strided_slice %83 {offsets = [0, 0], sizes = [8, 32], strides = [1, 1]} : vector<8x96xf32> to vector<8x32xf32>
    %85 = vector.extract_strided_slice %83 {offsets = [0, 32], sizes = [8, 32], strides = [1, 1]} : vector<8x96xf32> to vector<8x32xf32>
    %86 = vector.extract_strided_slice %83 {offsets = [0, 64], sizes = [8, 32], strides = [1, 1]} : vector<8x96xf32> to vector<8x32xf32>
    %87 = vector.extract_strided_slice %77 {offsets = [0, 96], sizes = [8, 32], strides = [1, 1]} : vector<8x128xf32> to vector<8x32xf32>
    %88 = math.tanh %87 : vector<8x32xf32>
    %89 = arith.mulf %85, %68 : vector<8x32xf32>
    %90 = arith.mulf %84, %88 : vector<8x32xf32>
    %91 = arith.addf %89, %90 : vector<8x32xf32>
    %92 = math.tanh %91 : vector<8x32xf32>
    %93 = arith.mulf %86, %92 : vector<8x32xf32>
    %94 = tpu.concatenate %24, %47, %70, %93 in 1 : vector<8x32xf32>, vector<8x32xf32>, vector<8x32xf32>, vector<8x32xf32> -> vector<8x128xf32>
    %95 = arith.index_cast %c0_i32 : i32 to index
    %c0_21 = arith.constant 0 : index
    %c0_22 = arith.constant 0 : index
    %96 = vector.load %arg3[%95, %c0_21, %c0_22] : memref<2x8x128xf32, #tpu.memory_space<vmem>>, vector<1x8x128xf32>
    %97 = vector.shape_cast %96 : vector<1x8x128xf32> to vector<8x128xf32>
    %98 = vector.shape_cast %94 : vector<8x128xf32> to vector<1x8x128xf32>
    tpu.vector_store %arg3[%95, %c0_21, %c0_22], %98 {strides = array<i32>} : memref<2x8x128xf32, #tpu.memory_space<vmem>>, vector<1x8x128xf32>,
    %c1_i32_23 = arith.constant 1 : i32
    %c4_i32_24 = arith.constant 4 : i32
    %99 = arith.muli %c1_i32_23, %c4_i32_24 : i32
    %c0_i32_25 = arith.constant 0 : i32
    %100 = arith.addi %99, %c0_i32_25 : i32
    %101 = arith.index_cast %100 : i32 to index
    %c0_26 = arith.constant 0 : index
    %c0_27 = arith.constant 0 : index
    %102 = vector.load %arg1[%101, %c0_26, %c0_27] : memref<8x8x128xf32, #tpu.memory_space<vmem>>, vector<1x8x128xf32>
    %103 = vector.shape_cast %102 : vector<1x8x128xf32> to vector<8x128xf32>
    %cst_28 = arith.constant dense<0.000000e+00> : vector<8x128xf32>
    %104 = tpu.matmul %93, %0, %cst_28 {dimension_numbers = #tpu.dot_dimension_numbers<[1], [0], [0], [1], [0, 0, 1, 1], [], []>} : vector<8x32xf32>, vector<32x128xf32>, vector<8x128xf32> -> vector<8x128xf32>
    %105 = arith.addf %103, %104 : vector<8x128xf32>
    %106 = vector.extract_strided_slice %105 {offsets = [0, 0], sizes = [8, 96], strides = [1, 1]} : vector<8x128xf32> to vector<8x96xf32>
    %107 = arith.negf %106 : vector<8x96xf32>
    %108 = math.exp %107 : vector<8x96xf32>
    %cst_29 = arith.constant 1.000000e+00 : f32
    %109 = vector.broadcast %cst_29 : f32 to vector<8x96xf32>
    %110 = arith.addf %109, %108 : vector<8x96xf32>
    %111 = arith.divf %109, %110 : vector<8x96xf32>
    %112 = vector.extract_strided_slice %111 {offsets = [0, 0], sizes = [8, 32], strides = [1, 1]} : vector<8x96xf32> to vector<8x32xf32>
    %113 = vector.extract_strided_slice %111 {offsets = [0, 32], sizes = [8, 32], strides = [1, 1]} : vector<8x96xf32> to vector<8x32xf32>
    %114 = vector.extract_strided_slice %111 {offsets = [0, 64], sizes = [8, 32], strides = [1, 1]} : vector<8x96xf32> to vector<8x32xf32>
    %115 = vector.extract_strided_slice %105 {offsets = [0, 96], sizes = [8, 32], strides = [1, 1]} : vector<8x128xf32> to vector<8x32xf32>
    %116 = math.tanh %115 : vector<8x32xf32>
    %117 = arith.mulf %113, %91 : vector<8x32xf32>
    %118 = arith.mulf %112, %116 : vector<8x32xf32>
    %119 = arith.addf %117, %118 : vector<8x32xf32>
    %120 = math.tanh %119 : vector<8x32xf32>
    %121 = arith.mulf %114, %120 : vector<8x32xf32>
    %c4_i32_30 = arith.constant 4 : i32
    %122 = arith.muli %c1_i32_23, %c4_i32_30 : i32
    %c1_i32_31 = arith.constant 1 : i32
    %123 = arith.addi %122, %c1_i32_31 : i32
    %124 = arith.index_cast %123 : i32 to index
    %c0_32 = arith.constant 0 : index
    %c0_33 = arith.constant 0 : index
    %125 = vector.load %arg1[%124, %c0_32, %c0_33] : memref<8x8x128xf32, #tpu.memory_space<vmem>>, vector<1x8x128xf32>
    %126 = vector.shape_cast %125 : vector<1x8x128xf32> to vector<8x128xf32>
    %cst_34 = arith.constant dense<0.000000e+00> : vector<8x128xf32>
    %127 = tpu.matmul %121, %0, %cst_34 {dimension_numbers = #tpu.dot_dimension_numbers<[1], [0], [0], [1], [0, 0, 1, 1], [], []>} : vector<8x32xf32>, vector<32x128xf32>, vector<8x128xf32> -> vector<8x128xf32>
    %128 = arith.addf %126, %127 : vector<8x128xf32>
    %129 = vector.extract_strided_slice %128 {offsets = [0, 0], sizes = [8, 96], strides = [1, 1]} : vector<8x128xf32> to vector<8x96xf32>
    %130 = arith.negf %129 : vector<8x96xf32>
    %131 = math.exp %130 : vector<8x96xf32>
    %cst_35 = arith.constant 1.000000e+00 : f32
    %132 = vector.broadcast %cst_35 : f32 to vector<8x96xf32>
    %133 = arith.addf %132, %131 : vector<8x96xf32>
    %134 = arith.divf %132, %133 : vector<8x96xf32>
    %135 = vector.extract_strided_slice %134 {offsets = [0, 0], sizes = [8, 32], strides = [1, 1]} : vector<8x96xf32> to vector<8x32xf32>
    %136 = vector.extract_strided_slice %134 {offsets = [0, 32], sizes = [8, 32], strides = [1, 1]} : vector<8x96xf32> to vector<8x32xf32>
    %137 = vector.extract_strided_slice %134 {offsets = [0, 64], sizes = [8, 32], strides = [1, 1]} : vector<8x96xf32> to vector<8x32xf32>
    %138 = vector.extract_strided_slice %128 {offsets = [0, 96], sizes = [8, 32], strides = [1, 1]} : vector<8x128xf32> to vector<8x32xf32>
    %139 = math.tanh %138 : vector<8x32xf32>
    %140 = arith.mulf %136, %119 : vector<8x32xf32>
    %141 = arith.mulf %135, %139 : vector<8x32xf32>
    %142 = arith.addf %140, %141 : vector<8x32xf32>
    %143 = math.tanh %142 : vector<8x32xf32>
    %144 = arith.mulf %137, %143 : vector<8x32xf32>
    %c4_i32_36 = arith.constant 4 : i32
    %145 = arith.muli %c1_i32_23, %c4_i32_36 : i32
    %c2_i32_37 = arith.constant 2 : i32
    %146 = arith.addi %145, %c2_i32_37 : i32
    %147 = arith.index_cast %146 : i32 to index
    %c0_38 = arith.constant 0 : index
    %c0_39 = arith.constant 0 : index
    %148 = vector.load %arg1[%147, %c0_38, %c0_39] : memref<8x8x128xf32, #tpu.memory_space<vmem>>, vector<1x8x128xf32>
    %149 = vector.shape_cast %148 : vector<1x8x128xf32> to vector<8x128xf32>
    %cst_40 = arith.constant dense<0.000000e+00> : vector<8x128xf32>
    %150 = tpu.matmul %144, %0, %cst_40 {dimension_numbers = #tpu.dot_dimension_numbers<[1], [0], [0], [1], [0, 0, 1, 1], [], []>} : vector<8x32xf32>, vector<32x128xf32>, vector<8x128xf32> -> vector<8x128xf32>
    %151 = arith.addf %149, %150 : vector<8x128xf32>
    %152 = vector.extract_strided_slice %151 {offsets = [0, 0], sizes = [8, 96], strides = [1, 1]} : vector<8x128xf32> to vector<8x96xf32>
    %153 = arith.negf %152 : vector<8x96xf32>
    %154 = math.exp %153 : vector<8x96xf32>
    %cst_41 = arith.constant 1.000000e+00 : f32
    %155 = vector.broadcast %cst_41 : f32 to vector<8x96xf32>
    %156 = arith.addf %155, %154 : vector<8x96xf32>
    %157 = arith.divf %155, %156 : vector<8x96xf32>
    %158 = vector.extract_strided_slice %157 {offsets = [0, 0], sizes = [8, 32], strides = [1, 1]} : vector<8x96xf32> to vector<8x32xf32>
    %159 = vector.extract_strided_slice %157 {offsets = [0, 32], sizes = [8, 32], strides = [1, 1]} : vector<8x96xf32> to vector<8x32xf32>
    %160 = vector.extract_strided_slice %157 {offsets = [0, 64], sizes = [8, 32], strides = [1, 1]} : vector<8x96xf32> to vector<8x32xf32>
    %161 = vector.extract_strided_slice %151 {offsets = [0, 96], sizes = [8, 32], strides = [1, 1]} : vector<8x128xf32> to vector<8x32xf32>
    %162 = math.tanh %161 : vector<8x32xf32>
    %163 = arith.mulf %159, %142 : vector<8x32xf32>
    %164 = arith.mulf %158, %162 : vector<8x32xf32>
    %165 = arith.addf %163, %164 : vector<8x32xf32>
    %166 = math.tanh %165 : vector<8x32xf32>
    %167 = arith.mulf %160, %166 : vector<8x32xf32>
    %c4_i32_42 = arith.constant 4 : i32
    %168 = arith.muli %c1_i32_23, %c4_i32_42 : i32
    %c3_i32_43 = arith.constant 3 : i32
    %169 = arith.addi %168, %c3_i32_43 : i32
    %170 = arith.index_cast %169 : i32 to index
    %c0_44 = arith.constant 0 : index
    %c0_45 = arith.constant 0 : index
    %171 = vector.load %arg1[%170, %c0_44, %c0_45] : memref<8x8x128xf32, #tpu.memory_space<vmem>>, vector<1x8x128xf32>
    %172 = vector.shape_cast %171 : vector<1x8x128xf32> to vector<8x128xf32>
    %cst_46 = arith.constant dense<0.000000e+00> : vector<8x128xf32>
    %173 = tpu.matmul %167, %0, %cst_46 {dimension_numbers = #tpu.dot_dimension_numbers<[1], [0], [0], [1], [0, 0, 1, 1], [], []>} : vector<8x32xf32>, vector<32x128xf32>, vector<8x128xf32> -> vector<8x128xf32>
    %174 = arith.addf %172, %173 : vector<8x128xf32>
    %175 = vector.extract_strided_slice %174 {offsets = [0, 0], sizes = [8, 96], strides = [1, 1]} : vector<8x128xf32> to vector<8x96xf32>
    %176 = arith.negf %175 : vector<8x96xf32>
    %177 = math.exp %176 : vector<8x96xf32>
    %cst_47 = arith.constant 1.000000e+00 : f32
    %178 = vector.broadcast %cst_47 : f32 to vector<8x96xf32>
    %179 = arith.addf %178, %177 : vector<8x96xf32>
    %180 = arith.divf %178, %179 : vector<8x96xf32>
    %181 = vector.extract_strided_slice %180 {offsets = [0, 0], sizes = [8, 32], strides = [1, 1]} : vector<8x96xf32> to vector<8x32xf32>
    %182 = vector.extract_strided_slice %180 {offsets = [0, 32], sizes = [8, 32], strides = [1, 1]} : vector<8x96xf32> to vector<8x32xf32>
    %183 = vector.extract_strided_slice %180 {offsets = [0, 64], sizes = [8, 32], strides = [1, 1]} : vector<8x96xf32> to vector<8x32xf32>
    %184 = vector.extract_strided_slice %174 {offsets = [0, 96], sizes = [8, 32], strides = [1, 1]} : vector<8x128xf32> to vector<8x32xf32>
    %185 = math.tanh %184 : vector<8x32xf32>
    %186 = arith.mulf %182, %165 : vector<8x32xf32>
    %187 = arith.mulf %181, %185 : vector<8x32xf32>
    %188 = arith.addf %186, %187 : vector<8x32xf32>
    %189 = math.tanh %188 : vector<8x32xf32>
    %190 = arith.mulf %183, %189 : vector<8x32xf32>
    %191 = tpu.concatenate %121, %144, %167, %190 in 1 : vector<8x32xf32>, vector<8x32xf32>, vector<8x32xf32>, vector<8x32xf32> -> vector<8x128xf32>
    %192 = arith.index_cast %c1_i32_23 : i32 to index
    %c0_48 = arith.constant 0 : index
    %c0_49 = arith.constant 0 : index
    %193 = vector.load %arg3[%192, %c0_48, %c0_49] : memref<2x8x128xf32, #tpu.memory_space<vmem>>, vector<1x8x128xf32>
    %194 = vector.shape_cast %193 : vector<1x8x128xf32> to vector<8x128xf32>
    %195 = vector.shape_cast %191 : vector<8x128xf32> to vector<1x8x128xf32>
    tpu.vector_store %arg3[%192, %c0_48, %c0_49], %195 {strides = array<i32>} : memref<2x8x128xf32, #tpu.memory_space<vmem>>, vector<1x8x128xf32>,
    %c2_i32_50 = arith.constant 2 : i32
    return
  }
  func.func @transform_0(%arg0: i32) -> (i32, i32, i32) {
    %c0_i32 = arith.constant 0 : i32
    %c0_i32_0 = arith.constant 0 : i32
    %c0_i32_1 = arith.constant 0 : i32
    return %c0_i32, %arg0, %c0_i32_0 : i32, i32, i32
  }
  func.func @transform_1(%arg0: i32) -> (i32, i32) {
    %c0_i32 = arith.constant 0 : i32
    %c0_i32_0 = arith.constant 0 : i32
    %c0_i32_1 = arith.constant 0 : i32
    return %c0_i32, %c0_i32_0 : i32, i32
  }
  func.func @transform_2(%arg0: i32) -> (i32, i32, i32) {
    %c0_i32 = arith.constant 0 : i32
    %c0_i32_0 = arith.constant 0 : i32
    %c0_i32_1 = arith.constant 0 : i32
    return %c0_i32, %arg0, %c0_i32_0 : i32, i32, i32
  }
}

</mosaic_0001>

<llo_original>
// kernel: sentence_encoder_forward.1
$region0: #{sentence_encoder_forward.1}
  #allocation0 [shape = 'u32[]', space=smem, size = 0x4, offset = 0x4, fixed_abs, tag = 'smem constant byte address 0x4 - core index']
  #allocation1 [shape = 'u32[144,128]{1,0:T(1,128)}', space=vmem, size = 0x12000, scoped, tag = 'internal scratch']
  %s0 = inlined_call_operand.vmem [shape: f32[8,8,128], index: 0, kind: input, shape index: {}]
  %s1 = inlined_call_operand.vmem [shape: f32[32,128], index: 1, kind: input, shape index: {}]
  %s2 = inlined_call_operand.vmem [shape: f32[2,8,128], index: 2, kind: output, shape index: {}]
  %s3 = sld [smem:[#allocation0]]
  $region18: #{sentence_encoder_forward.1} parent=0
    _
  %s5 = ssub.s32 1, %s3
  %s6 = scalar_select 0, %s5, %s3
  // Predicated region
  $region2: #{sentence_encoder_forward.1} parent=0 // pred_check
    _
  $region3: #{sentence_encoder_forward.1} parent=0 // pred_check_branch
    %8 = sbr.rel (0) target = $region5
  $region4: #{sentence_encoder_forward.1} parent=0 // pred_region
    _
  $region5: #{sentence_encoder_forward.1} parent=0 // pred_fallthru
    _
  // Predicated region
  $region6: #{sentence_encoder_forward.1} parent=0 // pred_check
    _
  $region7: #{sentence_encoder_forward.1} parent=0 // pred_check_branch
    %10 = sbr.rel (0) target = $region9
  $region8: #{sentence_encoder_forward.1} parent=0 // pred_region
    _
  $region9: #{sentence_encoder_forward.1} parent=0 // pred_fallthru
    _
  %v11 = vld [vmem:[%s1] sm:$0xff]
  %v12 = vld [vmem:[%s1 + $0x8] sm:$0xff]
  %v13 = vld [vmem:[%s1 + $0x10] sm:$0xff]
  %v14 = vld [vmem:[%s1 + $0x18] sm:$0xff]
  %v15 = vld [vmem:[%s0] sm:$0xff]
  %vm16 = vcmask 261120
  %v18 = vsel %vm16, 0.0, 0
  %20 = vmatprep.subr.mxu0 0.0
  %21 = vmatpush1.msra.mxu0 0.0
  %22 = vmatprep.subr.mxu0 0.0
  %23 = vmatpush1.msra.mxu0 0.0
  %24 = vmatprep.subr.mxu0 0.0
  %25 = vmatpush1.msra.mxu0 0.0
  %26 = vmatprep.subr.mxu0 0.0
  %27 = vmatpush1.msra.mxu0 0.0
  %28 = vmatprep.subr.mxu0 0.0
  %29 = vmatpush1.msra.mxu0 0.0
  %30 = vmatprep.subr.mxu0 0.0
  %31 = vmatpush1.msra.mxu0 0.0
  %32 = vmatprep.subr.mxu0 0.0
  %33 = vmatpush1.msra.mxu0 0.0
  %34 = vmatprep.subr.mxu0 0.0
  %35 = vmatpush1.msra.mxu0 0.0
  %36 = vmatprep.subr.mxu0 0.0
  %37 = vmatpush1.msra.mxu0 0.0
  %38 = vmatprep.subr.mxu0 0.0
  %39 = vmatpush1.msra.mxu0 0.0
  %40 = vmatprep.subr.mxu0 0.0
  %41 = vmatpush1.msra.mxu0 0.0
  %42 = vmatprep.subr.mxu0 0.0
  %43 = vmatpush1.msra.mxu0 0.0
  %44 = vmatprep.subr.mxu0 0.0
  %45 = vmatpush1.msra.mxu0 %v14
  %46 = vmatprep.subr.mxu0 0.0
  %47 = vmatpush1.msra.mxu0 %v13
  %48 = vmatprep.subr.mxu0 0.0
  %49 = vmatpush1.msra.mxu0 %v12
  %50 = vmatprep.subr.mxu0 0.0
  %51 = vmatpush1.msra.mxu0 %v11
  %52 = vmatprep.subr.mxu0 0.0
  %53 = vmatpush2.msra.mxu0 0.0
  %54 = vmatprep.subr.mxu0 0.0
  %55 = vmatpush2.msra.mxu0 0.0
  %56 = vmatprep.subr.mxu0 0.0
  %57 = vmatpush2.msra.mxu0 0.0
  %58 = vmatprep.subr.mxu0 0.0
  %59 = vmatpush2.msra.mxu0 0.0
  %60 = vmatprep.subr.mxu0 0.0
  %61 = vmatpush2.msra.mxu0 0.0
  %62 = vmatprep.subr.mxu0 0.0
  %63 = vmatpush2.msra.mxu0 0.0
  %64 = vmatprep.subr.mxu0 0.0
  %65 = vmatpush2.msra.mxu0 0.0
  %66 = vmatprep.subr.mxu0 0.0
  %67 = vmatpush2.msra.mxu0 0.0
  %68 = vmatprep.subr.mxu0 0.0
  %69 = vmatpush2.msra.mxu0 0.0
  %70 = vmatprep.subr.mxu0 0.0
  %71 = vmatpush2.msra.mxu0 0.0
  %72 = vmatprep.subr.mxu0 0.0
  %73 = vmatpush2.msra.mxu0 0.0
  %74 = vmatprep.subr.mxu0 0.0
  %75 = vmatpush2.msra.mxu0 0.0
  %76 = vmatprep.subr.mxu0 0.0
  %77 = vmatpush2.msra.mxu0 0.0
  %78 = vmatprep.subr.mxu0 0.0
  %79 = vmatpush2.msra.mxu0 0.0
  %80 = vmatprep.subr.mxu0 0.0
  %81 = vmatpush2.msra.mxu0 0.0
  %82 = vmatprep.subr.mxu0 0.0
  %83 = vmatpush2.msra.mxu0 0.0
  %84 = vmatprep.mubr.f32.mxu0 0.0
  %85 = vmatmul.mubr.f32.gmra.mxu0 %v18
  %v86 = vpop.f32.mrf.mxu0
  %v87 = vadd.f32 0.0, %v86
  %v88 = vpop.f32.mrf.mxu0
  %89 = vdwg.mxu0
  %v90 = vadd.f32 %v15, %v87
  %v91 = vxor.u32 %v90, 2147483648
  %v92 = vmul.f32 %v91, 1.442695
  %v93 = vpow.pop %v92
  %v94 = vadd.f32 %v93, 1.0
  %v95 = vrcp.pop %v94
  %v96 = vmul.f32 1.0, %v95
  %v97 = vtanh.pop %v90
  %v98 = vmul.f32 %v96, 0.0
  %100 = vrot.lane.b32.xlu0 %v97, 32
  %v101 = vpop.permute.xlu0 %100
  %v103 = vmul.f32 %v96, %v101
  %105 = vrot.lane.b32.xlu0 %v103, 32
  %v106 = vpop.permute.xlu0 %105
  %v108 = vadd.f32 %v98, %v106
  %v109 = vtanh.pop %v108
  %111 = vrot.lane.b32.xlu0 %v109, 32
  %v112 = vpop.permute.xlu0 %111
  %v114 = vmul.f32 %v96, %v112
  %s115 = scalar_lea.vmem %s0, 8
  %v116 = vld [vmem:[%s115] sm:$0xff]
  %118 = vrot.lane.b32.xlu0 %v114, 64
  %v119 = vpop.permute.xlu0 %118
  %v120 = vsel %vm16, %v119, 0
  %122 = vmatprep.subr.mxu0 0.0
  %123 = vmatpush1.msra.mxu0 0.0
  %124 = vmatprep.subr.mxu0 0.0
  %125 = vmatpush1.msra.mxu0 0.0
  %126 = vmatprep.subr.mxu0 0.0
  %127 = vmatpush1.msra.mxu0 0.0
  %128 = vmatprep.subr.mxu0 0.0
  %129 = vmatpush1.msra.mxu0 0.0
  %130 = vmatprep.subr.mxu0 0.0
  %131 = vmatpush1.msra.mxu0 0.0
  %132 = vmatprep.subr.mxu0 0.0
  %133 = vmatpush1.msra.mxu0 0.0
  %134 = vmatprep.subr.mxu0 0.0
  %135 = vmatpush1.msra.mxu0 0.0
  %136 = vmatprep.subr.mxu0 0.0
  %137 = vmatpush1.msra.mxu0 0.0
  %138 = vmatprep.subr.mxu0 0.0
  %139 = vmatpush1.msra.mxu0 0.0
  %140 = vmatprep.subr.mxu0 0.0
  %141 = vmatpush1.msra.mxu0 0.0
  %142 = vmatprep.subr.mxu0 0.0
  %143 = vmatpush1.msra.mxu0 0.0
  %144 = vmatprep.subr.mxu0 0.0
  %145 = vmatpush1.msra.mxu0 0.0
  %146 = vmatprep.subr.mxu0 0.0
  %147 = vmatpush1.msra.mxu0 %v14
  %148 = vmatprep.subr.mxu0 0.0
  %149 = vmatpush1.msra.mxu0 %v13
  %150 = vmatprep.subr.mxu0 0.0
  %151 = vmatpush1.msra.mxu0 %v12
  %152 = vmatprep.subr.mxu0 0.0
  %153 = vmatpush1.msra.mxu0 %v11
  %154 = vmatprep.subr.mxu0 0.0
  %155 = vmatpush2.msra.mxu0 0.0
  %156 = vmatprep.subr.mxu0 0.0
  %157 = vmatpush2.msra.mxu0 0.0
  %158 = vmatprep.subr.mxu0 0.0
  %159 = vmatpush2.msra.mxu0 0.0
  %160 = vmatprep.subr.mxu0 0.0
  %161 = vmatpush2.msra.mxu0 0.0
  %162 = vmatprep.subr.mxu0 0.0
  %163 = vmatpush2.msra.mxu0 0.0
  %164 = vmatprep.subr.mxu0 0.0
  %165 = vmatpush2.msra.mxu0 0.0
  %166 = vmatprep.subr.mxu0 0.0
  %167 = vmatpush2.msra.mxu0 0.0
  %168 = vmatprep.subr.mxu0 0.0
  %169 = vmatpush2.msra.mxu0 0.0
  %170 = vmatprep.subr.mxu0 0.0
  %171 = vmatpush2.msra.mxu0 0.0
  %172 = vmatprep.subr.mxu0 0.0
  %173 = vmatpush2.msra.mxu0 0.0
  %174 = vmatprep.subr.mxu0 0.0
  %175 = vmatpush2.msra.mxu0 0.0
  %176 = vmatprep.subr.mxu0 0.0
  %177 = vmatpush2.msra.mxu0 0.0
  %178 = vmatprep.subr.mxu0 0.0
  %179 = vmatpush2.msra.mxu0 0.0
  %180 = vmatprep.subr.mxu0 0.0
  %181 = vmatpush2.msra.mxu0 0.0
  %182 = vmatprep.subr.mxu0 0.0
  %183 = vmatpush2.msra.mxu0 0.0
  %184 = vmatprep.subr.mxu0 0.0
  %185 = vmatpush2.msra.mxu0 0.0
  %186 = vmatprep.mubr.f32.mxu0 0.0
  %187 = vmatmul.mubr.f32.gmra.mxu0 %v120
  %v188 = vpop.f32.mrf.mxu0
  %v189 = vadd.f32 0.0, %v188
  %v190 = vpop.f32.mrf.mxu0
  %191 = vdwg.mxu0
  %v192 = vadd.f32 %v116, %v189
  %v193 = vxor.u32 %v192, 2147483648
  %v194 = vmul.f32 %v193, 1.442695
  %v195 = vpow.pop %v194
  %v196 = vadd.f32 %v195, 1.0
  %v197 = vrcp.pop %v196
  %v198 = vmul.f32 1.0, %v197
  %v199 = vtanh.pop %v192
  %v200 = vmul.f32 %v198, %v108
  %202 = vrot.lane.b32.xlu0 %v199, 32
  %v203 = vpop.permute.xlu0 %202
  %v205 = vmul.f32 %v198, %v203
  %207 = vrot.lane.b32.xlu0 %v205, 32
  %v208 = vpop.permute.xlu0 %207
  %v210 = vadd.f32 %v200, %v208
  %v211 = vtanh.pop %v210
  %213 = vrot.lane.b32.xlu0 %v211, 32
  %v214 = vpop.permute.xlu0 %213
  %v216 = vmul.f32 %v198, %v214
  %s217 = scalar_lea.vmem %s0, 16
  %v218 = vld [vmem:[%s217] sm:$0xff]
  %220 = vrot.lane.b32.xlu0 %v216, 64
  %v221 = vpop.permute.xlu0 %220
  %v222 = vsel %vm16, %v221, 0
  %224 = vmatprep.subr.mxu0 0.0
  %225 = vmatpush1.msra.mxu0 0.0
  %226 = vmatprep.subr.mxu0 0.0
  %227 = vmatpush1.msra.mxu0 0.0
  %228 = vmatprep.subr.mxu0 0.0
  %229 = vmatpush1.msra.mxu0 0.0
  %230 = vmatprep.subr.mxu0 0.0
  %231 = vmatpush1.msra.mxu0 0.0
  %232 = vmatprep.subr.mxu0 0.0
  %233 = vmatpush1.msra.mxu0 0.0
  %234 = vmatprep.subr.mxu0 0.0
  %235 = vmatpush1.msra.mxu0 0.0
  %236 = vmatprep.subr.mxu0 0.0
  %237 = vmatpush1.msra.mxu0 0.0
  %238 = vmatprep.subr.mxu0 0.0
  %239 = vmatpush1.msra.mxu0 0.0
  %240 = vmatprep.subr.mxu0 0.0
  %241 = vmatpush1.msra.mxu0 0.0
  %242 = vmatprep.subr.mxu0 0.0
  %243 = vmatpush1.msra.mxu0 0.0
  %244 = vmatprep.subr.mxu0 0.0
  %245 = vmatpush1.msra.mxu0 0.0
  %246 = vmatprep.subr.mxu0 0.0
  %247 = vmatpush1.msra.mxu0 0.0
  %248 = vmatprep.subr.mxu0 0.0
  %249 = vmatpush1.msra.mxu0 %v14
  %250 = vmatprep.subr.mxu0 0.0
  %251 = vmatpush1.msra.mxu0 %v13
  %252 = vmatprep.subr.mxu0 0.0
  %253 = vmatpush1.msra.mxu0 %v12
  %254 = vmatprep.subr.mxu0 0.0
  %255 = vmatpush1.msra.mxu0 %v11
  %256 = vmatprep.subr.mxu0 0.0
  %257 = vmatpush2.msra.mxu0 0.0
  %258 = vmatprep.subr.mxu0 0.0
  %259 = vmatpush2.msra.mxu0 0.0
  %260 = vmatprep.subr.mxu0 0.0
  %261 = vmatpush2.msra.mxu0 0.0
  %262 = vmatprep.subr.mxu0 0.0
  %263 = vmatpush2.msra.mxu0 0.0
  %264 = vmatprep.subr.mxu0 0.0
  %265 = vmatpush2.msra.mxu0 0.0
  %266 = vmatprep.subr.mxu0 0.0
  %267 = vmatpush2.msra.mxu0 0.0
  %268 = vmatprep.subr.mxu0 0.0
  %269 = vmatpush2.msra.mxu0 0.0
  %270 = vmatprep.subr.mxu0 0.0
  %271 = vmatpush2.msra.mxu0 0.0
  %272 = vmatprep.subr.mxu0 0.0
  %273 = vmatpush2.msra.mxu0 0.0
  %274 = vmatprep.subr.mxu0 0.0
  %275 = vmatpush2.msra.mxu0 0.0
  %276 = vmatprep.subr.mxu0 0.0
  %277 = vmatpush2.msra.mxu0 0.0
  %278 = vmatprep.subr.mxu0 0.0
  %279 = vmatpush2.msra.mxu0 0.0
  %280 = vmatprep.subr.mxu0 0.0
  %281 = vmatpush2.msra.mxu0 0.0
  %282 = vmatprep.subr.mxu0 0.0
  %283 = vmatpush2.msra.mxu0 0.0
  %284 = vmatprep.subr.mxu0 0.0
  %285 = vmatpush2.msra.mxu0 0.0
  %286 = vmatprep.subr.mxu0 0.0
  %287 = vmatpush2.msra.mxu0 0.0
  %288 = vmatprep.mubr.f32.mxu0 0.0
  %289 = vmatmul.mubr.f32.gmra.mxu0 %v222
  %v290 = vpop.f32.mrf.mxu0
  %v291 = vadd.f32 0.0, %v290
  %v292 = vpop.f32.mrf.mxu0
  %293 = vdwg.mxu0
  %v294 = vadd.f32 %v218, %v291
  %v295 = vxor.u32 %v294, 2147483648
  %v296 = vmul.f32 %v295, 1.442695
  %v297 = vpow.pop %v296
  %v298 = vadd.f32 %v297, 1.0
  %v299 = vrcp.pop %v298
  %v300 = vmul.f32 1.0, %v299
  %v301 = vtanh.pop %v294
  %v302 = vmul.f32 %v300, %v210
  %304 = vrot.lane.b32.xlu0 %v301, 32
  %v305 = vpop.permute.xlu0 %304
  %v307 = vmul.f32 %v300, %v305
  %309 = vrot.lane.b32.xlu0 %v307, 32
  %v310 = vpop.permute.xlu0 %309
  %v312 = vadd.f32 %v302, %v310
  %v313 = vtanh.pop %v312
  %315 = vrot.lane.b32.xlu0 %v313, 32
  %v316 = vpop.permute.xlu0 %315
  %v318 = vmul.f32 %v300, %v316
  %s319 = scalar_lea.vmem %s0, 24
  %v320 = vld [vmem:[%s319] sm:$0xff]
  %322 = vrot.lane.b32.xlu0 %v318, 64
  %v323 = vpop.permute.xlu0 %322
  %v324 = vsel %vm16, %v323, 0
  %326 = vmatprep.subr.mxu0 0.0
  %327 = vmatpush1.msra.mxu0 0.0
  %328 = vmatprep.subr.mxu0 0.0
  %329 = vmatpush1.msra.mxu0 0.0
  %330 = vmatprep.subr.mxu0 0.0
  %331 = vmatpush1.msra.mxu0 0.0
  %332 = vmatprep.subr.mxu0 0.0
  %333 = vmatpush1.msra.mxu0 0.0
  %334 = vmatprep.subr.mxu0 0.0
  %335 = vmatpush1.msra.mxu0 0.0
  %336 = vmatprep.subr.mxu0 0.0
  %337 = vmatpush1.msra.mxu0 0.0
  %338 = vmatprep.subr.mxu0 0.0
  %339 = vmatpush1.msra.mxu0 0.0
  %340 = vmatprep.subr.mxu0 0.0
  %341 = vmatpush1.msra.mxu0 0.0
  %342 = vmatprep.subr.mxu0 0.0
  %343 = vmatpush1.msra.mxu0 0.0
  %344 = vmatprep.subr.mxu0 0.0
  %345 = vmatpush1.msra.mxu0 0.0
  %346 = vmatprep.subr.mxu0 0.0
  %347 = vmatpush1.msra.mxu0 0.0
  %348 = vmatprep.subr.mxu0 0.0
  %349 = vmatpush1.msra.mxu0 0.0
  %350 = vmatprep.subr.mxu0 0.0
  %351 = vmatpush1.msra.mxu0 %v14
  %352 = vmatprep.subr.mxu0 0.0
  %353 = vmatpush1.msra.mxu0 %v13
  %354 = vmatprep.subr.mxu0 0.0
  %355 = vmatpush1.msra.mxu0 %v12
  %356 = vmatprep.subr.mxu0 0.0
  %357 = vmatpush1.msra.mxu0 %v11
  %358 = vmatprep.subr.mxu0 0.0
  %359 = vmatpush2.msra.mxu0 0.0
  %360 = vmatprep.subr.mxu0 0.0
  %361 = vmatpush2.msra.mxu0 0.0
  %362 = vmatprep.subr.mxu0 0.0
  %363 = vmatpush2.msra.mxu0 0.0
  %364 = vmatprep.subr.mxu0 0.0
  %365 = vmatpush2.msra.mxu0 0.0
  %366 = vmatprep.subr.mxu0 0.0
  %367 = vmatpush2.msra.mxu0 0.0
  %368 = vmatprep.subr.mxu0 0.0
  %369 = vmatpush2.msra.mxu0 0.0
  %370 = vmatprep.subr.mxu0 0.0
  %371 = vmatpush2.msra.mxu0 0.0
  %372 = vmatprep.subr.mxu0 0.0
  %373 = vmatpush2.msra.mxu0 0.0
  %374 = vmatprep.subr.mxu0 0.0
  %375 = vmatpush2.msra.mxu0 0.0
  %376 = vmatprep.subr.mxu0 0.0
  %377 = vmatpush2.msra.mxu0 0.0
  %378 = vmatprep.subr.mxu0 0.0
  %379 = vmatpush2.msra.mxu0 0.0
  %380 = vmatprep.subr.mxu0 0.0
  %381 = vmatpush2.msra.mxu0 0.0
  %382 = vmatprep.subr.mxu0 0.0
  %383 = vmatpush2.msra.mxu0 0.0
  %384 = vmatprep.subr.mxu0 0.0
  %385 = vmatpush2.msra.mxu0 0.0
  %386 = vmatprep.subr.mxu0 0.0
  %387 = vmatpush2.msra.mxu0 0.0
  %388 = vmatprep.subr.mxu0 0.0
  %389 = vmatpush2.msra.mxu0 0.0
  %390 = vmatprep.mubr.f32.mxu0 0.0
  %391 = vmatmul.mubr.f32.gmra.mxu0 %v324
  %v392 = vpop.f32.mrf.mxu0
  %v393 = vadd.f32 0.0, %v392
  %v394 = vpop.f32.mrf.mxu0
  %395 = vdwg.mxu0
  %v396 = vadd.f32 %v320, %v393
  %v397 = vxor.u32 %v396, 2147483648
  %v398 = vmul.f32 %v397, 1.442695
  %v399 = vpow.pop %v398
  %v400 = vadd.f32 %v399, 1.0
  %v401 = vrcp.pop %v400
  %v402 = vmul.f32 1.0, %v401
  %v403 = vtanh.pop %v396
  %v404 = vmul.f32 %v402, %v312
  %406 = vrot.lane.b32.xlu0 %v403, 32
  %v407 = vpop.permute.xlu0 %406
  %v409 = vmul.f32 %v402, %v407
  %411 = vrot.lane.b32.xlu0 %v409, 32
  %v412 = vpop.permute.xlu0 %411
  %v414 = vadd.f32 %v404, %v412
  %v415 = vtanh.pop %v414
  %417 = vrot.lane.b32.xlu0 %v415, 32
  %v418 = vpop.permute.xlu0 %417
  %v420 = vmul.f32 %v402, %v418
  %422 = vrot.lane.b32.xlu0 %v216, 96
  %v423 = vpop.permute.xlu0 %422
  %426 = vrot.lane.b32.xlu0 %v420, 32
  %v427 = vpop.permute.xlu0 %426
  %v429 = vsel %vm16, %v119, %v423
  %vm430 = vcmask 523264
  %v431 = vsel %vm430, %v429, %v318
  %vm432 = vcmask 785408
  %v433 = vsel %vm432, %v431, %v427
  %434 = vst [vmem:[%s2] sm:$0xff] %v433
  %s435 = scalar_lea.vmem %s0, 32
  %v436 = vld [vmem:[%s435] sm:$0xff]
  %437 = vrot.lane.b32.xlu0 %v420, 64
  %v438 = vpop.permute.xlu0 %437
  %v439 = vsel %vm16, %v438, 0
  %441 = vmatprep.subr.mxu0 0.0
  %442 = vmatpush1.msra.mxu0 0.0
  %443 = vmatprep.subr.mxu0 0.0
  %444 = vmatpush1.msra.mxu0 0.0
  %445 = vmatprep.subr.mxu0 0.0
  %446 = vmatpush1.msra.mxu0 0.0
  %447 = vmatprep.subr.mxu0 0.0
  %448 = vmatpush1.msra.mxu0 0.0
  %449 = vmatprep.subr.mxu0 0.0
  %450 = vmatpush1.msra.mxu0 0.0
  %451 = vmatprep.subr.mxu0 0.0
  %452 = vmatpush1.msra.mxu0 0.0
  %453 = vmatprep.subr.mxu0 0.0
  %454 = vmatpush1.msra.mxu0 0.0
  %455 = vmatprep.subr.mxu0 0.0
  %456 = vmatpush1.msra.mxu0 0.0
  %457 = vmatprep.subr.mxu0 0.0
  %458 = vmatpush1.msra.mxu0 0.0
  %459 = vmatprep.subr.mxu0 0.0
  %460 = vmatpush1.msra.mxu0 0.0
  %461 = vmatprep.subr.mxu0 0.0
  %462 = vmatpush1.msra.mxu0 0.0
  %463 = vmatprep.subr.mxu0 0.0
  %464 = vmatpush1.msra.mxu0 0.0
  %465 = vmatprep.subr.mxu0 0.0
  %466 = vmatpush1.msra.mxu0 %v14
  %467 = vmatprep.subr.mxu0 0.0
  %468 = vmatpush1.msra.mxu0 %v13
  %469 = vmatprep.subr.mxu0 0.0
  %470 = vmatpush1.msra.mxu0 %v12
  %471 = vmatprep.subr.mxu0 0.0
  %472 = vmatpush1.msra.mxu0 %v11
  %473 = vmatprep.subr.mxu0 0.0
  %474 = vmatpush2.msra.mxu0 0.0
  %475 = vmatprep.subr.mxu0 0.0
  %476 = vmatpush2.msra.mxu0 0.0
  %477 = vmatprep.subr.mxu0 0.0
  %478 = vmatpush2.msra.mxu0 0.0
  %479 = vmatprep.subr.mxu0 0.0
  %480 = vmatpush2.msra.mxu0 0.0
  %481 = vmatprep.subr.mxu0 0.0
  %482 = vmatpush2.msra.mxu0 0.0
  %483 = vmatprep.subr.mxu0 0.0
  %484 = vmatpush2.msra.mxu0 0.0
  %485 = vmatprep.subr.mxu0 0.0
  %486 = vmatpush2.msra.mxu0 0.0
  %487 = vmatprep.subr.mxu0 0.0
  %488 = vmatpush2.msra.mxu0 0.0
  %489 = vmatprep.subr.mxu0 0.0
  %490 = vmatpush2.msra.mxu0 0.0
  %491 = vmatprep.subr.mxu0 0.0
  %492 = vmatpush2.msra.mxu0 0.0
  %493 = vmatprep.subr.mxu0 0.0
  %494 = vmatpush2.msra.mxu0 0.0
  %495 = vmatprep.subr.mxu0 0.0
  %496 = vmatpush2.msra.mxu0 0.0
  %497 = vmatprep.subr.mxu0 0.0
  %498 = vmatpush2.msra.mxu0 0.0
  %499 = vmatprep.subr.mxu0 0.0
  %500 = vmatpush2.msra.mxu0 0.0
  %501 = vmatprep.subr.mxu0 0.0
  %502 = vmatpush2.msra.mxu0 0.0
  %503 = vmatprep.subr.mxu0 0.0
  %504 = vmatpush2.msra.mxu0 0.0
  %505 = vmatprep.mubr.f32.mxu0 0.0
  %506 = vmatmul.mubr.f32.gmra.mxu0 %v439
  %v507 = vpop.f32.mrf.mxu0
  %v508 = vadd.f32 0.0, %v507
  %v509 = vpop.f32.mrf.mxu0
  %510 = vdwg.mxu0
  %v511 = vadd.f32 %v436, %v508
  %v512 = vxor.u32 %v511, 2147483648
  %v513 = vmul.f32 %v512, 1.442695
  %v514 = vpow.pop %v513
  %v515 = vadd.f32 %v514, 1.0
  %v516 = vrcp.pop %v515
  %v517 = vmul.f32 1.0, %v516
  %v518 = vtanh.pop %v511
  %v519 = vmul.f32 %v517, %v414
  %521 = vrot.lane.b32.xlu0 %v518, 32
  %v522 = vpop.permute.xlu0 %521
  %v524 = vmul.f32 %v517, %v522
  %526 = vrot.lane.b32.xlu0 %v524, 32
  %v527 = vpop.permute.xlu0 %526
  %v529 = vadd.f32 %v519, %v527
  %v530 = vtanh.pop %v529
  %532 = vrot.lane.b32.xlu0 %v530, 32
  %v533 = vpop.permute.xlu0 %532
  %v535 = vmul.f32 %v517, %v533
  %s536 = scalar_lea.vmem %s0, 40
  %v537 = vld [vmem:[%s536] sm:$0xff]
  %539 = vrot.lane.b32.xlu0 %v535, 64
  %v540 = vpop.permute.xlu0 %539
  %v541 = vsel %vm16, %v540, 0
  %543 = vmatprep.subr.mxu0 0.0
  %544 = vmatpush1.msra.mxu0 0.0
  %545 = vmatprep.subr.mxu0 0.0
  %546 = vmatpush1.msra.mxu0 0.0
  %547 = vmatprep.subr.mxu0 0.0
  %548 = vmatpush1.msra.mxu0 0.0
  %549 = vmatprep.subr.mxu0 0.0
  %550 = vmatpush1.msra.mxu0 0.0
  %551 = vmatprep.subr.mxu0 0.0
  %552 = vmatpush1.msra.mxu0 0.0
  %553 = vmatprep.subr.mxu0 0.0
  %554 = vmatpush1.msra.mxu0 0.0
  %555 = vmatprep.subr.mxu0 0.0
  %556 = vmatpush1.msra.mxu0 0.0
  %557 = vmatprep.subr.mxu0 0.0
  %558 = vmatpush1.msra.mxu0 0.0
  %559 = vmatprep.subr.mxu0 0.0
  %560 = vmatpush1.msra.mxu0 0.0
  %561 = vmatprep.subr.mxu0 0.0
  %562 = vmatpush1.msra.mxu0 0.0
  %563 = vmatprep.subr.mxu0 0.0
  %564 = vmatpush1.msra.mxu0 0.0
  %565 = vmatprep.subr.mxu0 0.0
  %566 = vmatpush1.msra.mxu0 0.0
  %567 = vmatprep.subr.mxu0 0.0
  %568 = vmatpush1.msra.mxu0 %v14
  %569 = vmatprep.subr.mxu0 0.0
  %570 = vmatpush1.msra.mxu0 %v13
  %571 = vmatprep.subr.mxu0 0.0
  %572 = vmatpush1.msra.mxu0 %v12
  %573 = vmatprep.subr.mxu0 0.0
  %574 = vmatpush1.msra.mxu0 %v11
  %575 = vmatprep.subr.mxu0 0.0
  %576 = vmatpush2.msra.mxu0 0.0
  %577 = vmatprep.subr.mxu0 0.0
  %578 = vmatpush2.msra.mxu0 0.0
  %579 = vmatprep.subr.mxu0 0.0
  %580 = vmatpush2.msra.mxu0 0.0
  %581 = vmatprep.subr.mxu0 0.0
  %582 = vmatpush2.msra.mxu0 0.0
  %583 = vmatprep.subr.mxu0 0.0
  %584 = vmatpush2.msra.mxu0 0.0
  %585 = vmatprep.subr.mxu0 0.0
  %586 = vmatpush2.msra.mxu0 0.0
  %587 = vmatprep.subr.mxu0 0.0
  %588 = vmatpush2.msra.mxu0 0.0
  %589 = vmatprep.subr.mxu0 0.0
  %590 = vmatpush2.msra.mxu0 0.0
  %591 = vmatprep.subr.mxu0 0.0
  %592 = vmatpush2.msra.mxu0 0.0
  %593 = vmatprep.subr.mxu0 0.0
  %594 = vmatpush2.msra.mxu0 0.0
  %595 = vmatprep.subr.mxu0 0.0
  %596 = vmatpush2.msra.mxu0 0.0
  %597 = vmatprep.subr.mxu0 0.0
  %598 = vmatpush2.msra.mxu0 0.0
  %599 = vmatprep.subr.mxu0 0.0
  %600 = vmatpush2.msra.mxu0 0.0
  %601 = vmatprep.subr.mxu0 0.0
  %602 = vmatpush2.msra.mxu0 0.0
  %603 = vmatprep.subr.mxu0 0.0
  %604 = vmatpush2.msra.mxu0 0.0
  %605 = vmatprep.subr.mxu0 0.0
  %606 = vmatpush2.msra.mxu0 0.0
  %607 = vmatprep.mubr.f32.mxu0 0.0
  %608 = vmatmul.mubr.f32.gmra.mxu0 %v541
  %v609 = vpop.f32.mrf.mxu0
  %v610 = vadd.f32 0.0, %v609
  %v611 = vpop.f32.mrf.mxu0
  %612 = vdwg.mxu0
  %v613 = vadd.f32 %v537, %v610
  %v614 = vxor.u32 %v613, 2147483648
  %v615 = vmul.f32 %v614, 1.442695
  %v616 = vpow.pop %v615
  %v617 = vadd.f32 %v616, 1.0
  %v618 = vrcp.pop %v617
  %v619 = vmul.f32 1.0, %v618
  %v620 = vtanh.pop %v613
  %v621 = vmul.f32 %v619, %v529
  %623 = vrot.lane.b32.xlu0 %v620, 32
  %v624 = vpop.permute.xlu0 %623
  %v626 = vmul.f32 %v619, %v624
  %628 = vrot.lane.b32.xlu0 %v626, 32
  %v629 = vpop.permute.xlu0 %628
  %v631 = vadd.f32 %v621, %v629
  %v632 = vtanh.pop %v631
  %634 = vrot.lane.b32.xlu0 %v632, 32
  %v635 = vpop.permute.xlu0 %634
  %v637 = vmul.f32 %v619, %v635
  %s638 = scalar_lea.vmem %s0, 48
  %v639 = vld [vmem:[%s638] sm:$0xff]
  %641 = vrot.lane.b32.xlu0 %v637, 64
  %v642 = vpop.permute.xlu0 %641
  %v643 = vsel %vm16, %v642, 0
  %645 = vmatprep.subr.mxu0 0.0
  %646 = vmatpush1.msra.mxu0 0.0
  %647 = vmatprep.subr.mxu0 0.0
  %648 = vmatpush1.msra.mxu0 0.0
  %649 = vmatprep.subr.mxu0 0.0
  %650 = vmatpush1.msra.mxu0 0.0
  %651 = vmatprep.subr.mxu0 0.0
  %652 = vmatpush1.msra.mxu0 0.0
  %653 = vmatprep.subr.mxu0 0.0
  %654 = vmatpush1.msra.mxu0 0.0
  %655 = vmatprep.subr.mxu0 0.0
  %656 = vmatpush1.msra.mxu0 0.0
  %657 = vmatprep.subr.mxu0 0.0
  %658 = vmatpush1.msra.mxu0 0.0
  %659 = vmatprep.subr.mxu0 0.0
  %660 = vmatpush1.msra.mxu0 0.0
  %661 = vmatprep.subr.mxu0 0.0
  %662 = vmatpush1.msra.mxu0 0.0
  %663 = vmatprep.subr.mxu0 0.0
  %664 = vmatpush1.msra.mxu0 0.0
  %665 = vmatprep.subr.mxu0 0.0
  %666 = vmatpush1.msra.mxu0 0.0
  %667 = vmatprep.subr.mxu0 0.0
  %668 = vmatpush1.msra.mxu0 0.0
  %669 = vmatprep.subr.mxu0 0.0
  %670 = vmatpush1.msra.mxu0 %v14
  %671 = vmatprep.subr.mxu0 0.0
  %672 = vmatpush1.msra.mxu0 %v13
  %673 = vmatprep.subr.mxu0 0.0
  %674 = vmatpush1.msra.mxu0 %v12
  %675 = vmatprep.subr.mxu0 0.0
  %676 = vmatpush1.msra.mxu0 %v11
  %677 = vmatprep.subr.mxu0 0.0
  %678 = vmatpush2.msra.mxu0 0.0
  %679 = vmatprep.subr.mxu0 0.0
  %680 = vmatpush2.msra.mxu0 0.0
  %681 = vmatprep.subr.mxu0 0.0
  %682 = vmatpush2.msra.mxu0 0.0
  %683 = vmatprep.subr.mxu0 0.0
  %684 = vmatpush2.msra.mxu0 0.0
  %685 = vmatprep.subr.mxu0 0.0
  %686 = vmatpush2.msra.mxu0 0.0
  %687 = vmatprep.subr.mxu0 0.0
  %688 = vmatpush2.msra.mxu0 0.0
  %689 = vmatprep.subr.mxu0 0.0
  %690 = vmatpush2.msra.mxu0 0.0
  %691 = vmatprep.subr.mxu0 0.0
  %692 = vmatpush2.msra.mxu0 0.0
  %693 = vmatprep.subr.mxu0 0.0
  %694 = vmatpush2.msra.mxu0 0.0
  %695 = vmatprep.subr.mxu0 0.0
  %696 = vmatpush2.msra.mxu0 0.0
  %697 = vmatprep.subr.mxu0 0.0
  %698 = vmatpush2.msra.mxu0 0.0
  %699 = vmatprep.subr.mxu0 0.0
  %700 = vmatpush2.msra.mxu0 0.0
  %701 = vmatprep.subr.mxu0 0.0
  %702 = vmatpush2.msra.mxu0 0.0
  %703 = vmatprep.subr.mxu0 0.0
  %704 = vmatpush2.msra.mxu0 0.0
  %705 = vmatprep.subr.mxu0 0.0
  %706 = vmatpush2.msra.mxu0 0.0
  %707 = vmatprep.subr.mxu0 0.0
  %708 = vmatpush2.msra.mxu0 0.0
  %709 = vmatprep.mubr.f32.mxu0 0.0
  %710 = vmatmul.mubr.f32.gmra.mxu0 %v643
  %v711 = vpop.f32.mrf.mxu0
  %v712 = vadd.f32 0.0, %v711
  %v713 = vpop.f32.mrf.mxu0
  %714 = vdwg.mxu0
  %v715 = vadd.f32 %v639, %v712
  %v716 = vxor.u32 %v715, 2147483648
  %v717 = vmul.f32 %v716, 1.442695
  %v718 = vpow.pop %v717
  %v719 = vadd.f32 %v718, 1.0
  %v720 = vrcp.pop %v719
  %v721 = vmul.f32 1.0, %v720
  %v722 = vtanh.pop %v715
  %v723 = vmul.f32 %v721, %v631
  %725 = vrot.lane.b32.xlu0 %v722, 32
  %v726 = vpop.permute.xlu0 %725
  %v728 = vmul.f32 %v721, %v726
  %730 = vrot.lane.b32.xlu0 %v728, 32
  %v731 = vpop.permute.xlu0 %730
  %v733 = vadd.f32 %v723, %v731
  %v734 = vtanh.pop %v733
  %736 = vrot.lane.b32.xlu0 %v734, 32
  %v737 = vpop.permute.xlu0 %736
  %v739 = vmul.f32 %v721, %v737
  %s740 = scalar_lea.vmem %s0, 56
  %v741 = vld [vmem:[%s740] sm:$0xff]
  %743 = vrot.lane.b32.xlu0 %v739, 64
  %v744 = vpop.permute.xlu0 %743
  %v745 = vsel %vm16, %v744, 0
  %747 = vmatprep.subr.mxu0 0.0
  %748 = vmatpush1.msra.mxu0 0.0
  %749 = vmatprep.subr.mxu0 0.0
  %750 = vmatpush1.msra.mxu0 0.0
  %751 = vmatprep.subr.mxu0 0.0
  %752 = vmatpush1.msra.mxu0 0.0
  %753 = vmatprep.subr.mxu0 0.0
  %754 = vmatpush1.msra.mxu0 0.0
  %755 = vmatprep.subr.mxu0 0.0
  %756 = vmatpush1.msra.mxu0 0.0
  %757 = vmatprep.subr.mxu0 0.0
  %758 = vmatpush1.msra.mxu0 0.0
  %759 = vmatprep.subr.mxu0 0.0
  %760 = vmatpush1.msra.mxu0 0.0
  %761 = vmatprep.subr.mxu0 0.0
  %762 = vmatpush1.msra.mxu0 0.0
  %763 = vmatprep.subr.mxu0 0.0
  %764 = vmatpush1.msra.mxu0 0.0
  %765 = vmatprep.subr.mxu0 0.0
  %766 = vmatpush1.msra.mxu0 0.0
  %767 = vmatprep.subr.mxu0 0.0
  %768 = vmatpush1.msra.mxu0 0.0
  %769 = vmatprep.subr.mxu0 0.0
  %770 = vmatpush1.msra.mxu0 0.0
  %771 = vmatprep.subr.mxu0 0.0
  %772 = vmatpush1.msra.mxu0 %v14
  %773 = vmatprep.subr.mxu0 0.0
  %774 = vmatpush1.msra.mxu0 %v13
  %775 = vmatprep.subr.mxu0 0.0
  %776 = vmatpush1.msra.mxu0 %v12
  %777 = vmatprep.subr.mxu0 0.0
  %778 = vmatpush1.msra.mxu0 %v11
  %779 = vmatprep.subr.mxu0 0.0
  %780 = vmatpush2.msra.mxu0 0.0
  %781 = vmatprep.subr.mxu0 0.0
  %782 = vmatpush2.msra.mxu0 0.0
  %783 = vmatprep.subr.mxu0 0.0
  %784 = vmatpush2.msra.mxu0 0.0
  %785 = vmatprep.subr.mxu0 0.0
  %786 = vmatpush2.msra.mxu0 0.0
  %787 = vmatprep.subr.mxu0 0.0
  %788 = vmatpush2.msra.mxu0 0.0
  %789 = vmatprep.subr.mxu0 0.0
  %790 = vmatpush2.msra.mxu0 0.0
  %791 = vmatprep.subr.mxu0 0.0
  %792 = vmatpush2.msra.mxu0 0.0
  %793 = vmatprep.subr.mxu0 0.0
  %794 = vmatpush2.msra.mxu0 0.0
  %795 = vmatprep.subr.mxu0 0.0
  %796 = vmatpush2.msra.mxu0 0.0
  %797 = vmatprep.subr.mxu0 0.0
  %798 = vmatpush2.msra.mxu0 0.0
  %799 = vmatprep.subr.mxu0 0.0
  %800 = vmatpush2.msra.mxu0 0.0
  %801 = vmatprep.subr.mxu0 0.0
  %802 = vmatpush2.msra.mxu0 0.0
  %803 = vmatprep.subr.mxu0 0.0
  %804 = vmatpush2.msra.mxu0 0.0
  %805 = vmatprep.subr.mxu0 0.0
  %806 = vmatpush2.msra.mxu0 0.0
  %807 = vmatprep.subr.mxu0 0.0
  %808 = vmatpush2.msra.mxu0 0.0
  %809 = vmatprep.subr.mxu0 0.0
  %810 = vmatpush2.msra.mxu0 0.0
  %811 = vmatprep.mubr.f32.mxu0 0.0
  %812 = vmatmul.mubr.f32.gmra.mxu0 %v745
  %v813 = vpop.f32.mrf.mxu0
  %v814 = vadd.f32 0.0, %v813
  %v815 = vpop.f32.mrf.mxu0
  %816 = vdwg.mxu0
  %v817 = vadd.f32 %v741, %v814
  %v818 = vxor.u32 %v817, 2147483648
  %v819 = vmul.f32 %v818, 1.442695
  %v820 = vpow.pop %v819
  %v821 = vadd.f32 %v820, 1.0
  %v822 = vrcp.pop %v821
  %v823 = vmul.f32 1.0, %v822
  %v824 = vtanh.pop %v817
  %v825 = vmul.f32 %v823, %v733
  %827 = vrot.lane.b32.xlu0 %v824, 32
  %v828 = vpop.permute.xlu0 %827
  %v830 = vmul.f32 %v823, %v828
  %832 = vrot.lane.b32.xlu0 %v830, 32
  %v833 = vpop.permute.xlu0 %832
  %v835 = vadd.f32 %v825, %v833
  %v836 = vtanh.pop %v835
  %838 = vrot.lane.b32.xlu0 %v836, 32
  %v839 = vpop.permute.xlu0 %838
  %v841 = vmul.f32 %v823, %v839
  %843 = vrot.lane.b32.xlu0 %v637, 96
  %v844 = vpop.permute.xlu0 %843
  %847 = vrot.lane.b32.xlu0 %v841, 32
  %v848 = vpop.permute.xlu0 %847
  %v850 = vsel %vm16, %v540, %v844
  %v851 = vsel %vm430, %v850, %v739
  %v852 = vsel %vm432, %v851, %v848
  %s853 = scalar_lea.vmem %s2, 8
  %854 = vst [vmem:[%s853] sm:$0xff] %v852
  // Predicated region
  $region10: #{sentence_encoder_forward.1} parent=0 // pred_check
    _
  $region11: #{sentence_encoder_forward.1} parent=0 // pred_check_branch
    %856 = sbr.rel (0) target = $region13
  $region12: #{sentence_encoder_forward.1} parent=0 // pred_region
    _
  $region13: #{sentence_encoder_forward.1} parent=0 // pred_fallthru
    _
  // Predicated region
  $region14: #{sentence_encoder_forward.1} parent=0 // pred_check
    _
  $region15: #{sentence_encoder_forward.1} parent=0 // pred_check_branch
    %858 = sbr.rel (0) target = $region17
  $region16: #{sentence_encoder_forward.1} parent=0 // pred_region
    _
  $region17: #{sentence_encoder_forward.1} parent=0 // pred_fallthru
    _

</llo_original>
